<compile_context>
chip_gen: v7x
topology: tpu7x:2x2x1
jax: 0.10.0
libtpu: 0.0.40
codegen_flags: <defaults>
</compile_context>

<pallas_src>
import jax
import jax.numpy as jnp
from jax.experimental import pallas as pl
from jax.experimental.pallas import tpu as pltpu

# ----------------------------- configuration --------------------------------
D_MODEL = 128          # lane-dense (multiple of 128 lanes)
DIM_FF = 256
SEQ = 16               # T
BATCH = 16             # B  -> N = T*B = 256 rows
TILE_N = 128           # rows per grid step (sublane-aligned; grid = N/TILE_N)
EPS = 1e-5             # torch LayerNorm default eps


# ------------------------------ fused kernel ---------------------------------
# out = Linear2( Swish( Linear1( LayerNorm(x) ) ) ) on a (TILE_N, D) row tile.
# LayerNorm's affine (gamma/beta) is pre-folded into w1/b1 by prepare_params,
# so the kernel only normalizes (mean / rsqrt(var)) before the first matmul.
# Weights arrive already in bf16; activations are cast in-kernel; MXU
# accumulation stays f32.
def ff_kernel(x_ref, w1_ref, b1_ref, w2_ref, b2_ref, o_ref):
    x = x_ref[...]                                              # (TILE_N, D) f32
    mu = jnp.mean(x, axis=-1, keepdims=True)
    xc = x - mu                                                 # reused below
    var = jnp.mean(xc * xc, axis=-1, keepdims=True)
    xhat = xc * jax.lax.rsqrt(var + EPS)                        # LN (affine folded)

    # Linear(d_model -> dim_feedforward); bf16 operands, f32 accumulation (MXU).
    h = jnp.dot(xhat.astype(jnp.bfloat16), w1_ref[...],
                preferred_element_type=jnp.float32) + b1_ref[...]
    h = h * jax.nn.sigmoid(h)                                   # Switch (Swish)
    # (Dropout = identity in eval mode.)

    # Linear(dim_feedforward -> d_model); bf16 operands, f32 accumulation.
    y = jnp.dot(h.astype(jnp.bfloat16), w2_ref[...],
                preferred_element_type=jnp.float32) + b2_ref[...]
    o_ref[...] = y                                              # lane-dense vst


# ----------------------- one-time parameter preparation ----------------------
# Fold LayerNorm affine into the first Linear and cast weights to bf16 ONCE,
# outside the per-call jitted path:
#   (xhat * g + b) @ w1 + b1  ==  xhat @ (g[:,None] * w1) + (b1 + b @ w1)
def prepare_params(p):
    w1f = (p["ln_g"][:, None] * p["w1"]).astype(jnp.bfloat16)    # (D, F) bf16
    b1f = (p["b1"] + p["ln_b"] @ p["w1"]).reshape(1, DIM_FF)     # (1, F) f32
    return dict(
        w1f=w1f,
        b1f=b1f,
        w2=p["w2"].astype(jnp.bfloat16),                         # (F, D) bf16
        b2=p["b2"].reshape(1, D_MODEL),                          # (1, D) f32
    )


# ------------------------------- wrapper --------------------------------------
@jax.jit
def feedforward_forward(prepared, x):
    T, B, D = x.shape
    N = T * B
    x2 = x.reshape(N, D)                                         # free reshape

    # Pad rows to a TILE_N multiple (zeros normalize to zeros -> no NaNs).
    n_pad = (-N) % TILE_N
    if n_pad:
        x2 = jnp.pad(x2, ((0, n_pad), (0, 0)))
    n_rows = N + n_pad

    out = pl.pallas_call(
        ff_kernel,
        out_shape=jax.ShapeDtypeStruct((n_rows, D), jnp.float32),
        grid_spec=pltpu.PrefetchScalarGridSpec(
            num_scalar_prefetch=0,
            grid=(n_rows // TILE_N,),
            in_specs=[
                pl.BlockSpec((TILE_N, D), lambda i: (i, 0)),      # x rows
                pl.BlockSpec((D, DIM_FF), lambda i: (0, 0)),      # w1 (resident)
                pl.BlockSpec((1, DIM_FF), lambda i: (0, 0)),      # b1 (resident)
                pl.BlockSpec((DIM_FF, D), lambda i: (0, 0)),      # w2 (resident)
                pl.BlockSpec((1, D), lambda i: (0, 0)),           # b2 (resident)
            ],
            out_specs=pl.BlockSpec((TILE_N, D), lambda i: (i, 0)),
        ),
        compiler_params=pltpu.CompilerParams(
            dimension_semantics=("parallel",)),                   # megacore on v7x
    )(x2, prepared["w1f"], prepared["b1f"], prepared["w2"], prepared["b2"])

    if n_pad:
        out = out[:N]
    return out.reshape(T, B, D)


# -------------------------- deterministic parameters --------------------------
# Linear weights stored pre-transposed ((in, out) layout) so in-kernel matmuls
# are row-major / lane-dense. LayerNorm affine uses torch's default init.
def init_params(key):
    k1, k2, k3, k4 = jax.random.split(key, 4)
    D, F = D_MODEL, DIM_FF
    rnd = lambda k, shape: (0.1 * jax.random.normal(k, shape)).astype(jnp.float32)
    return dict(
        ln_g=jnp.ones((D,), jnp.float32),       # nn.LayerNorm default weight
        ln_b=jnp.zeros((D,), jnp.float32),      # nn.LayerNorm default bias
        w1=rnd(k1, (D, F)), b1=rnd(k2, (F,)),   # nn.Linear(D, F).weight.T / .bias
        w2=rnd(k3, (F, D)), b2=rnd(k4, (D,)),   # nn.Linear(F, D).weight.T / .bias
    )


# ----------------------------- pure-JAX reference -----------------------------
def feedforward_reference(p, x):
    mu = x.mean(-1, keepdims=True)
    var = ((x - mu) ** 2).mean(-1, keepdims=True)
    h = (x - mu) / jnp.sqrt(var + EPS) * p["ln_g"] + p["ln_b"]   # LayerNorm
    h = h @ p["w1"] + p["b1"]                                    # Linear
    h = h * jax.nn.sigmoid(h)                                    # Switch (Swish)
    return h @ p["w2"] + p["b2"]                                 # Linear


# ----------------------------------- main --------------------------------------
if __name__ == "__main__":
    key = jax.random.PRNGKey(0)
    pkey, xkey = jax.random.split(key)
    params = init_params(pkey)
    prepared = jax.tree_util.tree_map(jax.block_until_ready, prepare_params(params))
    x = jax.random.normal(xkey, (SEQ, BATCH, D_MODEL), dtype=jnp.float32)

    out = jax.block_until_ready(feedforward_forward(prepared, x))
    ref = jax.block_until_ready(feedforward_reference(params, x))

    assert out.shape == (SEQ, BATCH, D_MODEL)
    assert bool(jnp.all(jnp.isfinite(out)))
    max_err = float(jnp.max(jnp.abs(out - ref)))
    assert bool(jnp.allclose(out, ref, atol=2e-2, rtol=2e-2)), \
        f"max abs err {max_err}"
    print("KERNEL_OK")
</pallas_src>

<mosaic_0001>
module attributes {stable_mosaic.version = 11 : i64} {
  func.func @ff_kernel(%arg0: i32, %arg1: memref<128x128xf32, #tpu.memory_space<vmem>>, %arg2: memref<128x256xbf16, #tpu.memory_space<vmem>>, %arg3: memref<1x256xf32, #tpu.memory_space<vmem>>, %arg4: memref<256x128xbf16, #tpu.memory_space<vmem>>, %arg5: memref<1x128xf32, #tpu.memory_space<vmem>>, %arg6: memref<128x128xf32, #tpu.memory_space<vmem>>) attributes {dimension_semantics = [#tpu.dimension_semantics<parallel>], iteration_bounds = array<i64: 2>, scalar_prefetch = 0 : i64, scratch_operands = 0 : i64, tpu.core_type = #tpu.core_type<tc>, window_params = [{transform_indices = @transform_0, window_bounds = array<i64: 128, 128>}, {pipeline_mode = #tpu.pipeline_mode<synchronous>, transform_indices = @transform_1, window_bounds = array<i64: 128, 256>}, {pipeline_mode = #tpu.pipeline_mode<synchronous>, transform_indices = @transform_2, window_bounds = array<i64: 1, 256>}, {pipeline_mode = #tpu.pipeline_mode<synchronous>, transform_indices = @transform_3, window_bounds = array<i64: 256, 128>}, {pipeline_mode = #tpu.pipeline_mode<synchronous>, transform_indices = @transform_4, window_bounds = array<i64: 1, 128>}, {transform_indices = @transform_5, window_bounds = array<i64: 128, 128>}]} {
    %c0 = arith.constant 0 : index
    %c0_0 = arith.constant 0 : index
    %0 = vector.load %arg1[%c0, %c0_0] : memref<128x128xf32, #tpu.memory_space<vmem>>, vector<128x128xf32>
    %cst = arith.constant dense<0.000000e+00> : vector<128xf32>
    %1 = vector.multi_reduction <add>, %0, %cst [1] : vector<128x128xf32> to vector<128xf32>
    %2 = vector.shape_cast %1 : vector<128xf32> to vector<128x1xf32>
    %cst_1 = arith.constant 1.280000e+02 : f32
    %3 = vector.broadcast %cst_1 : f32 to vector<128x1xf32>
    %4 = arith.divf %2, %3 : vector<128x1xf32>
    %5 = vector.broadcast %4 : vector<128x1xf32> to vector<128x128xf32>
    %6 = arith.subf %0, %5 : vector<128x128xf32>
    %7 = arith.mulf %6, %6 : vector<128x128xf32>
    %cst_2 = arith.constant dense<0.000000e+00> : vector<128xf32>
    %8 = vector.multi_reduction <add>, %7, %cst_2 [1] : vector<128x128xf32> to vector<128xf32>
    %9 = vector.shape_cast %8 : vector<128xf32> to vector<128x1xf32>
    %cst_3 = arith.constant 1.280000e+02 : f32
    %10 = vector.broadcast %cst_3 : f32 to vector<128x1xf32>
    %11 = arith.divf %9, %10 : vector<128x1xf32>
    %cst_4 = arith.constant 9.99999974E-6 : f32
    %12 = vector.broadcast %cst_4 : f32 to vector<128x1xf32>
    %13 = arith.addf %11, %12 : vector<128x1xf32>
    %14 = math.rsqrt %13 : vector<128x1xf32>
    %15 = vector.broadcast %14 : vector<128x1xf32> to vector<128x128xf32>
    %16 = arith.mulf %6, %15 : vector<128x128xf32>
    %17 = arith.truncf %16 : vector<128x128xf32> to vector<128x128xbf16>
    %c0_5 = arith.constant 0 : index
    %c0_6 = arith.constant 0 : index
    %18 = vector.load %arg2[%c0_5, %c0_6] : memref<128x256xbf16, #tpu.memory_space<vmem>>, vector<128x256xbf16>
    %cst_7 = arith.constant dense<0.000000e+00> : vector<128x256xf32>
    %19 = tpu.matmul %17, %18, %cst_7 {dimension_numbers = #tpu.dot_dimension_numbers<[1], [0], [0], [1], [0, 0, 1, 1], [], []>} : vector<128x128xbf16>, vector<128x256xbf16>, vector<128x256xf32> -> vector<128x256xf32>
    %c0_8 = arith.constant 0 : index
    %c0_9 = arith.constant 0 : index
    %20 = vector.load %arg3[%c0_8, %c0_9] : memref<1x256xf32, #tpu.memory_space<vmem>>, vector<1x256xf32>
    %21 = vector.broadcast %20 : vector<1x256xf32> to vector<128x256xf32>
    %22 = arith.addf %19, %21 : vector<128x256xf32>
    %23 = arith.negf %22 : vector<128x256xf32>
    %24 = math.exp %23 : vector<128x256xf32>
    %cst_10 = arith.constant 1.000000e+00 : f32
    %25 = vector.broadcast %cst_10 : f32 to vector<128x256xf32>
    %26 = arith.addf %25, %24 : vector<128x256xf32>
    %27 = arith.divf %25, %26 : vector<128x256xf32>
    %28 = arith.mulf %22, %27 : vector<128x256xf32>
    %29 = arith.truncf %28 : vector<128x256xf32> to vector<128x256xbf16>
    %c0_11 = arith.constant 0 : index
    %c0_12 = arith.constant 0 : index
    %30 = vector.load %arg4[%c0_11, %c0_12] : memref<256x128xbf16, #tpu.memory_space<vmem>>, vector<256x128xbf16>
    %cst_13 = arith.constant dense<0.000000e+00> : vector<128x128xf32>
    %31 = tpu.matmul %29, %30, %cst_13 {dimension_numbers = #tpu.dot_dimension_numbers<[1], [0], [0], [1], [0, 0, 1, 1], [], []>} : vector<128x256xbf16>, vector<256x128xbf16>, vector<128x128xf32> -> vector<128x128xf32>
    %c0_14 = arith.constant 0 : index
    %c0_15 = arith.constant 0 : index
    %32 = vector.load %arg5[%c0_14, %c0_15] : memref<1x128xf32, #tpu.memory_space<vmem>>, vector<1x128xf32>
    %33 = vector.broadcast %32 : vector<1x128xf32> to vector<128x128xf32>
    %34 = arith.addf %31, %33 : vector<128x128xf32>
    %c0_16 = arith.constant 0 : index
    %c0_17 = arith.constant 0 : index
    %35 = vector.load %arg6[%c0_16, %c0_17] : memref<128x128xf32, #tpu.memory_space<vmem>>, vector<128x128xf32>
    tpu.vector_store %arg6[%c0_16, %c0_17], %34 {strides = array<i32>} : memref<128x128xf32, #tpu.memory_space<vmem>>, vector<128x128xf32>,
    return
  }
  func.func @transform_0(%arg0: i32) -> (i32, i32) {
    %c0_i32 = arith.constant 0 : i32
    %c0_i32_0 = arith.constant 0 : i32
    return %arg0, %c0_i32 : i32, i32
  }
  func.func @transform_1(%arg0: i32) -> (i32, i32) {
    %c0_i32 = arith.constant 0 : i32
    %c0_i32_0 = arith.constant 0 : i32
    %c0_i32_1 = arith.constant 0 : i32
    return %c0_i32, %c0_i32_0 : i32, i32
  }
  func.func @transform_2(%arg0: i32) -> (i32, i32) {
    %c0_i32 = arith.constant 0 : i32
    %c0_i32_0 = arith.constant 0 : i32
    %c0_i32_1 = arith.constant 0 : i32
    return %c0_i32, %c0_i32_0 : i32, i32
  }
  func.func @transform_3(%arg0: i32) -> (i32, i32) {
    %c0_i32 = arith.constant 0 : i32
    %c0_i32_0 = arith.constant 0 : i32
    %c0_i32_1 = arith.constant 0 : i32
    return %c0_i32, %c0_i32_0 : i32, i32
  }
  func.func @transform_4(%arg0: i32) -> (i32, i32) {
    %c0_i32 = arith.constant 0 : i32
    %c0_i32_0 = arith.constant 0 : i32
    %c0_i32_1 = arith.constant 0 : i32
    return %c0_i32, %c0_i32_0 : i32, i32
  }
  func.func @transform_5(%arg0: i32) -> (i32, i32) {
    %c0_i32 = arith.constant 0 : i32
    %c0_i32_0 = arith.constant 0 : i32
    return %arg0, %c0_i32 : i32, i32
  }
}

</mosaic_0001>

<llo_original>
// kernel: feedforward_forward.1
$region0: #{feedforward_forward.1}
  #allocation0 [shape = 'u32[]', space=smem, size = 0x4, offset = 0x4, fixed_abs, tag = 'smem constant byte address 0x4 - core index']
  #allocation1 [shape = 'u32[144,128]{1,0:T(1,128)}', space=vmem, size = 0x12000, scoped, tag = 'internal scratch']
  %s0 = inlined_call_operand.hbm [shape: f32[256,128], index: 0, kind: input, shape index: {}]
  %s1 = inlined_call_operand.hbm [shape: bf16[128,256], index: 1, kind: input, shape index: {}]
  %s2 = inlined_call_operand.vmem [shape: f32[1,256], index: 2, kind: input, shape index: {}]
  %s3 = inlined_call_operand.hbm [shape: bf16[256,128], index: 3, kind: input, shape index: {}]
  %s4 = inlined_call_operand.vmem [shape: f32[1,128], index: 4, kind: input, shape index: {}]
  %s5 = inlined_call_operand.hbm [shape: f32[256,128], index: 5, kind: output, shape index: {}]
  %s6 = sld [smem:[#allocation0]]
  $region65: #{feedforward_forward.1} parent=0
    _
  %s8 = ssub.s32 1, %s6
  %s9 = scalar_select 0, %s8, %s6
  $region1: #{feedforward_forward.1} parent=0
    #allocation2 [shape = 'u8[131072]{0}', space=vmem, size = 0x20000, scoped, tag = 'input window, operand 0']
    #allocation3 [shape = 's32[2]{0}', space=sflag, size = 0x8, scoped, tag = 'scoped memory for feedforward_forward.1']
    #allocation4 [shape = 's32[2]{0}', space=sflag, size = 0x8, scoped, tag = 'scoped memory for feedforward_forward.1']
    #allocation5 [shape = 'u8[65536]{0}', space=vmem, size = 0x10000, scoped, tag = 'input window, operand 1, single buffered']
    #allocation6 [shape = 's32[1]{0}', space=sflag, size = 0x4, scoped, tag = 'scoped memory for feedforward_forward.1']
    #allocation7 [shape = 'u8[65536]{0}', space=vmem, size = 0x10000, scoped, tag = 'input window, operand 3, single buffered']
    #allocation8 [shape = 'u8[131072]{0}', space=vmem, size = 0x20000, scoped, tag = 'output window, operand 0']
    %10 = vsyncpa [#allocation3], 0
    %s11 = scalar_lea.sflag [#allocation3], 1
    %12 = vsyncpa %s11, 0
    %13 = vsyncpa [#allocation6], 0
    %14 = vsyncpa [#allocation4], 0
    %s15 = scalar_lea.sflag [#allocation4], 1
    %16 = vsyncpa %s15, 0
    loop: start=0, step=1, limit=4
    $region2: #{feedforward_forward.1} parent=1 // loop_pre_header
      _
    $region3: #{feedforward_forward.1} parent=1 // loop_header
      %s18 = sphi 0, %s22
      %p19 = scmp.ge.s32.totalorder %s18, 4
      %s28 = sphi 0, %s30
      %s31 = sphi 0, %s28
      %s32 = sphi 0, %s31
      %s48 = sphi 0, %s32
      %s52 = sphi 0, %s52
      %s54 = sphi 0, %s52
      %s55 = sphi 0, %s54
      %s69 = sphi 0, %s55
      %s73 = sphi 0, %s73
      %s75 = sphi 0, %s73
      %s76 = sphi 0, %s75
      %s90 = sphi 0, %s76
      %s94 = sphi 0, %s94
      %s96 = sphi 0, %s94
      %s97 = sphi 0, %s96
      %s111 = sphi 0, %s97
      %s115 = sphi 0, %s115
      %s117 = sphi 0, %s115
      %s118 = sphi 0, %s117
      %s132 = sphi 0, %s118
      %s138 = sphi 0, %s140
      %s141 = sphi 0, %s138
      %s142 = sphi 0, %s141
      %s158 = sphi 0, %s142
    $region4: #{feedforward_forward.1} parent=1 // loop_header_branch
      %21 = sbr.rel (%p19) target = $region8
    $region5: #{feedforward_forward.1} parent=1 // loop_body
      %s23 = ssub.s32 %s18, 1
      %s24 = ssub.s32 %s18, 2
      %s25 = sadd.s32 %s18, 1
      %s26 = ssub.s32 %s18, %s25
      %p27 = scmp.eq.s32.totalorder %s26, 0
      %s29 = sadd.s32 %s28, 1
      %s30 = scalar_select %p27, %s28, %s29
      %p33 = pneg %p27
      %p34 = scmp.eq.s32.totalorder %s18, 1
      %p35 = por %p33, %p34
      %p36 = scmp.ne.s32.totalorder %s28, %s31
      %p37 = scmp.eq.s32.totalorder %s18, 0
      %p38 = por %p36, %p37
      %p39 = scmp.ne.s32.totalorder %s28, %s31
      %p40 = scmp.eq.s32.totalorder %s23, 1
      %p41 = por %p39, %p40
      %p42 = scmp.ne.s32.totalorder %s31, %s32
      %p43 = scmp.eq.s32.totalorder %s23, 0
      %p44 = por %p42, %p43
      %p45 = scmp.ne.s32.totalorder %s31, %s32
      %p46 = scmp.eq.s32.totalorder %s24, 1
      %p47 = por %p45, %p46
      %p49 = scmp.ne.s32.totalorder %s32, %s48
      %p50 = scmp.eq.s32.totalorder %s24, 0
      %p51 = por %p49, %p50
      %s53 = sadd.s32 %s52, 1
      %p56 = scmp.eq.s32.totalorder %s18, 1
      %p57 = scmp.ne.s32.totalorder %s52, %s54
      %p58 = scmp.eq.s32.totalorder %s18, 0
      %p59 = por %p57, %p58
      %p60 = scmp.ne.s32.totalorder %s52, %s54
      %p61 = scmp.eq.s32.totalorder %s23, 1
      %p62 = por %p60, %p61
      %p63 = scmp.ne.s32.totalorder %s54, %s55
      %p64 = scmp.eq.s32.totalorder %s23, 0
      %p65 = por %p63, %p64
      %p66 = scmp.ne.s32.totalorder %s54, %s55
      %p67 = scmp.eq.s32.totalorder %s24, 1
      %p68 = por %p66, %p67
      %p70 = scmp.ne.s32.totalorder %s55, %s69
      %p71 = scmp.eq.s32.totalorder %s24, 0
      %p72 = por %p70, %p71
      %s74 = sadd.s32 %s73, 1
      %p77 = scmp.eq.s32.totalorder %s18, 1
      %p78 = scmp.ne.s32.totalorder %s73, %s75
      %p79 = scmp.eq.s32.totalorder %s18, 0
      %p80 = por %p78, %p79
      %p81 = scmp.ne.s32.totalorder %s73, %s75
      %p82 = scmp.eq.s32.totalorder %s23, 1
      %p83 = por %p81, %p82
      %p84 = scmp.ne.s32.totalorder %s75, %s76
      %p85 = scmp.eq.s32.totalorder %s23, 0
      %p86 = por %p84, %p85
      %p87 = scmp.ne.s32.totalorder %s75, %s76
      %p88 = scmp.eq.s32.totalorder %s24, 1
      %p89 = por %p87, %p88
      %p91 = scmp.ne.s32.totalorder %s76, %s90
      %p92 = scmp.eq.s32.totalorder %s24, 0
      %p93 = por %p91, %p92
      %s95 = sadd.s32 %s94, 1
      %p98 = scmp.eq.s32.totalorder %s18, 1
      %p99 = scmp.ne.s32.totalorder %s94, %s96
      %p100 = scmp.eq.s32.totalorder %s18, 0
      %p101 = por %p99, %p100
      %p102 = scmp.ne.s32.totalorder %s94, %s96
      %p103 = scmp.eq.s32.totalorder %s23, 1
      %p104 = por %p102, %p103
      %p105 = scmp.ne.s32.totalorder %s96, %s97
      %p106 = scmp.eq.s32.totalorder %s23, 0
      %p107 = por %p105, %p106
      %p108 = scmp.ne.s32.totalorder %s96, %s97
      %p109 = scmp.eq.s32.totalorder %s24, 1
      %p110 = por %p108, %p109
      %p112 = scmp.ne.s32.totalorder %s97, %s111
      %p113 = scmp.eq.s32.totalorder %s24, 0
      %p114 = por %p112, %p113
      %s116 = sadd.s32 %s115, 1
      %p119 = scmp.eq.s32.totalorder %s18, 1
      %p120 = scmp.ne.s32.totalorder %s115, %s117
      %p121 = scmp.eq.s32.totalorder %s18, 0
      %p122 = por %p120, %p121
      %p123 = scmp.ne.s32.totalorder %s115, %s117
      %p124 = scmp.eq.s32.totalorder %s23, 1
      %p125 = por %p123, %p124
      %p126 = scmp.ne.s32.totalorder %s117, %s118
      %p127 = scmp.eq.s32.totalorder %s23, 0
      %p128 = por %p126, %p127
      %p129 = scmp.ne.s32.totalorder %s117, %s118
      %p130 = scmp.eq.s32.totalorder %s24, 1
      %p131 = por %p129, %p130
      %p133 = scmp.ne.s32.totalorder %s118, %s132
      %p134 = scmp.eq.s32.totalorder %s24, 0
      %p135 = por %p133, %p134
      %s136 = ssub.s32 %s18, %s25
      %p137 = scmp.eq.s32.totalorder %s136, 0
      %s139 = sadd.s32 %s138, 1
      %s140 = scalar_select %p137, %s138, %s139
      %p143 = pneg %p137
      %p144 = scmp.eq.s32.totalorder %s18, 1
      %p145 = por %p143, %p144
      %p146 = scmp.ne.s32.totalorder %s138, %s141
      %p147 = scmp.eq.s32.totalorder %s18, 0
      %p148 = por %p146, %p147
      %p149 = scmp.ne.s32.totalorder %s138, %s141
      %p150 = scmp.eq.s32.totalorder %s23, 1
      %p151 = por %p149, %p150
      %p152 = scmp.ne.s32.totalorder %s141, %s142
      %p153 = scmp.eq.s32.totalorder %s23, 0
      %p154 = por %p152, %p153
      %p155 = scmp.ne.s32.totalorder %s141, %s142
      %p156 = scmp.eq.s32.totalorder %s24, 1
      %p157 = por %p155, %p156
      %p159 = scmp.ne.s32.totalorder %s142, %s158
      %p160 = scmp.eq.s32.totalorder %s24, 0
      %p161 = por %p159, %p160
      %p162 = scmp.le.s32.totalorder 1, %s18
      %p163 = scmp.lt.s32.totalorder %s18, 3
      %p164 = pnand %p162, %p163
      %p165 = pneg %p164
      // Predicated region
      $region9: #{feedforward_forward.1} parent=5 // pred_check
        _
      $region10: #{feedforward_forward.1} parent=5 // pred_check_branch
        %167 = sbr.rel (%p164) target = $region12
      $region11: #{feedforward_forward.1} parent=5 // pred_region
        %s168 = ssub.s32 %s18, 1
        // Predicated region
        $region13: #{feedforward_forward.1} parent=11 // pred_check
          %p169 = pneg %p65
        $region14: #{feedforward_forward.1} parent=11 // pred_check_branch
          %171 = sbr.rel (%p169) target = $region16
        $region15: #{feedforward_forward.1} parent=11 // pred_region
          %s173 = ssub.s32 2048, 2048
          %174 = vsyncadd [#allocation6], %s173
          %s175 = sshll.u32 [#allocation5], 4
          %s176 = int_to_ptr.vmem [resolvable:$true] %s175
          %181 = dma.hbm_to_vmem [thread:$0]  %s1, 2048, %s176, [#allocation6], 128, 128, 8
        $region16: #{feedforward_forward.1} parent=11 // pred_fallthru
          _
        // Predicated region
        $region17: #{feedforward_forward.1} parent=11 // pred_check
          %p182 = pneg %p86
        $region18: #{feedforward_forward.1} parent=11 // pred_check_branch
          %184 = sbr.rel (%p182) target = $region20
        $region19: #{feedforward_forward.1} parent=11 // pred_region
          _
        $region20: #{feedforward_forward.1} parent=11 // pred_fallthru
          _
        // Predicated region
        $region21: #{feedforward_forward.1} parent=11 // pred_check
          %p185 = pneg %p107
        $region22: #{feedforward_forward.1} parent=11 // pred_check_branch
          %187 = sbr.rel (%p185) target = $region24
        $region23: #{feedforward_forward.1} parent=11 // pred_region
          %s189 = ssub.s32 2048, 2048
          %190 = vsyncadd [#allocation6], %s189
          %s191 = sshll.u32 [#allocation7], 4
          %s192 = int_to_ptr.vmem [resolvable:$true] %s191
          %197 = dma.hbm_to_vmem [thread:$0]  %s3, 2048, %s192, [#allocation6], 64, 64, 4
        $region24: #{feedforward_forward.1} parent=11 // pred_fallthru
          _
        // Predicated region
        $region25: #{feedforward_forward.1} parent=11 // pred_check
          %p198 = pneg %p128
        $region26: #{feedforward_forward.1} parent=11 // pred_check_branch
          %200 = sbr.rel (%p198) target = $region28
        $region27: #{feedforward_forward.1} parent=11 // pred_region
          _
        $region28: #{feedforward_forward.1} parent=11 // pred_fallthru
          _
      $region12: #{feedforward_forward.1} parent=5 // pred_fallthru
        _
      %p201 = scmp.lt.s32.totalorder %s18, 2
      // Predicated region
      $region29: #{feedforward_forward.1} parent=5 // pred_check
        %p202 = pneg %p201
      $region30: #{feedforward_forward.1} parent=5 // pred_check_branch
        %204 = sbr.rel (%p202) target = $region32
      $region31: #{feedforward_forward.1} parent=5 // pred_region
        // Predicated region
        $region33: #{feedforward_forward.1} parent=31 // pred_check
          %p205 = pneg %p38
        $region34: #{feedforward_forward.1} parent=31 // pred_check_branch
          %207 = sbr.rel (%p205) target = $region36
        $region35: #{feedforward_forward.1} parent=31 // pred_region
          %s208 = sand.u32 %s28, 1
          %s209 = scalar_lea.sflag [#allocation3], %s208
          %s210 = sand.u32 %s28, 1
          %s211 = smul.addr %s210, 128
          %s212 = scalar_lea.vmem [#allocation2], %s211
          %s213 = smul.u32 16, %s18
          %s215 = ssub.s32 2048, 2048
          %216 = vsyncadd %s209, %s215
          %s217 = smul.addr %s213, 128
          %s218 = scalar_lea.hbm %s0, %s217
          %s219 = sshll.u32 %s212, 4
          %s220 = int_to_ptr.vmem [resolvable:$true] %s219
          %225 = dma.hbm_to_vmem [thread:$0]  %s218, 2048, %s220, %s209, 128, 128, 8
        $region36: #{feedforward_forward.1} parent=31 // pred_fallthru
          _
      $region32: #{feedforward_forward.1} parent=5 // pred_fallthru
        _
      %p226 = scmp.le.s32.totalorder 1, %s18
      %p227 = scmp.lt.s32.totalorder %s18, 3
      %p228 = pnand %p226, %p227
      %p229 = pneg %p228
      // Predicated region
      $region37: #{feedforward_forward.1} parent=5 // pred_check
        _
      $region38: #{feedforward_forward.1} parent=5 // pred_check_branch
        %231 = sbr.rel (%p228) target = $region40
      $region39: #{feedforward_forward.1} parent=5 // pred_region
        %s232 = ssub.s32 %s18, 1
        %s233 = sand.u32 %s31, 1
        %s234 = scalar_lea.sflag [#allocation3], %s233
        %s235 = sand.u32 %s31, 1
        %s236 = smul.addr %s235, 128
        %s237 = scalar_lea.vmem [#allocation2], %s236
        // Predicated region
        $region41: #{feedforward_forward.1} parent=39 // pred_check
          %p238 = pneg %p44
        $region42: #{feedforward_forward.1} parent=39 // pred_check_branch
          %240 = sbr.rel (%p238) target = $region44
        $region43: #{feedforward_forward.1} parent=39 // pred_region
          %241 = dma.done %s234, 2048
        $region44: #{feedforward_forward.1} parent=39 // pred_fallthru
          _
        // Predicated region
        $region45: #{feedforward_forward.1} parent=39 // pred_check
          %p242 = pneg %p65
        $region46: #{feedforward_forward.1} parent=39 // pred_check_branch
          %244 = sbr.rel (%p242) target = $region48
        $region47: #{feedforward_forward.1} parent=39 // pred_region
          %245 = dma.done [#allocation6], 2048
        $region48: #{feedforward_forward.1} parent=39 // pred_fallthru
          _
        // Predicated region
        $region49: #{feedforward_forward.1} parent=39 // pred_check
          %p246 = pneg %p107
        $region50: #{feedforward_forward.1} parent=39 // pred_check_branch
          %248 = sbr.rel (%p246) target = $region52
        $region51: #{feedforward_forward.1} parent=39 // pred_region
          %249 = dma.done [#allocation6], 2048
        $region52: #{feedforward_forward.1} parent=39 // pred_fallthru
          _
        %s250 = sand.u32 %s31, 1
        %s251 = scalar_lea.sflag [#allocation3], %s250
        %s252 = sand.u32 %s31, 1
        %s253 = smul.addr %s252, 128
        %s254 = scalar_lea.vmem [#allocation2], %s253
        %p255 = pneg %p44
        %p256 = pneg %p41
        %p257 = pneg %p65
        %p258 = pneg %p62
        %p259 = pneg %p86
        %p260 = pneg %p83
        %p261 = pneg %p107
        %p262 = pneg %p104
        %p263 = pneg %p128
        %p264 = pneg %p125
        %p265 = pneg %p154
        %p266 = pneg %p151
        %s267 = sand.u32 %s141, 1
        %s268 = scalar_lea.sflag [#allocation4], %s267
        %s269 = sand.u32 %s141, 1
        %s270 = smul.addr %s269, 128
        %s271 = scalar_lea.vmem [#allocation8], %s270
        %s272 = smul.u32 16, %s23
        %s273 = smul.u32 16, %s23
        %v275 = vld [vmem:[%s237] sm:$0xff]
        %v276 = vld [vmem:[%s237 + $0x8] sm:$0xff]
        %v277 = vld [vmem:[%s237 + $0x10] sm:$0xff]
        %v278 = vld [vmem:[%s237 + $0x18] sm:$0xff]
        %v279 = vld [vmem:[%s237 + $0x20] sm:$0xff]
        %v280 = vld [vmem:[%s237 + $0x28] sm:$0xff]
        %v281 = vld [vmem:[%s237 + $0x30] sm:$0xff]
        %v282 = vld [vmem:[%s237 + $0x38] sm:$0xff]
        %v283 = vld [vmem:[%s237 + $0x40] sm:$0xff]
        %v284 = vld [vmem:[%s237 + $0x48] sm:$0xff]
        %v285 = vld [vmem:[%s237 + $0x50] sm:$0xff]
        %v286 = vld [vmem:[%s237 + $0x58] sm:$0xff]
        %v287 = vld [vmem:[%s237 + $0x60] sm:$0xff]
        %v288 = vld [vmem:[%s237 + $0x68] sm:$0xff]
        %v289 = vld [vmem:[%s237 + $0x70] sm:$0xff]
        %v290 = vld [vmem:[%s237 + $0x78] sm:$0xff]
        %291 = vadd.xlane.f32.xlu0 %v275
        %v292 = vpop.xlane.xlu0 %291
        %293 = vadd.xlane.f32.xlu0 %v276
        %v294 = vpop.xlane.xlu0 %293
        %295 = vadd.xlane.f32.xlu0 %v277
        %v296 = vpop.xlane.xlu0 %295
        %297 = vadd.xlane.f32.xlu0 %v278
        %v298 = vpop.xlane.xlu0 %297
        %299 = vadd.xlane.f32.xlu0 %v279
        %v300 = vpop.xlane.xlu0 %299
        %301 = vadd.xlane.f32.xlu0 %v280
        %v302 = vpop.xlane.xlu0 %301
        %303 = vadd.xlane.f32.xlu0 %v281
        %v304 = vpop.xlane.xlu0 %303
        %305 = vadd.xlane.f32.xlu0 %v282
        %v306 = vpop.xlane.xlu0 %305
        %307 = vadd.xlane.f32.xlu0 %v283
        %v308 = vpop.xlane.xlu0 %307
        %309 = vadd.xlane.f32.xlu0 %v284
        %v310 = vpop.xlane.xlu0 %309
        %311 = vadd.xlane.f32.xlu0 %v285
        %v312 = vpop.xlane.xlu0 %311
        %313 = vadd.xlane.f32.xlu0 %v286
        %v314 = vpop.xlane.xlu0 %313
        %315 = vadd.xlane.f32.xlu0 %v287
        %v316 = vpop.xlane.xlu0 %315
        %317 = vadd.xlane.f32.xlu0 %v288
        %v318 = vpop.xlane.xlu0 %317
        %319 = vadd.xlane.f32.xlu0 %v289
        %v320 = vpop.xlane.xlu0 %319
        %321 = vadd.xlane.f32.xlu0 %v290
        %v322 = vpop.xlane.xlu0 %321
        %v323 = vrcp.pop 128.0
        %v324 = vmul.f32 %v292, %v323
        %v325 = vmul.f32 %v294, %v323
        %v326 = vmul.f32 %v296, %v323
        %v327 = vmul.f32 %v298, %v323
        %v328 = vmul.f32 %v300, %v323
        %v329 = vmul.f32 %v302, %v323
        %v330 = vmul.f32 %v304, %v323
        %v331 = vmul.f32 %v306, %v323
        %v332 = vmul.f32 %v308, %v323
        %v333 = vmul.f32 %v310, %v323
        %v334 = vmul.f32 %v312, %v323
        %v335 = vmul.f32 %v314, %v323
        %v336 = vmul.f32 %v316, %v323
        %v337 = vmul.f32 %v318, %v323
        %v338 = vmul.f32 %v320, %v323
        %v339 = vmul.f32 %v322, %v323
        %v340 = vsub.f32 %v275, %v324
        %v341 = vsub.f32 %v276, %v325
        %v342 = vsub.f32 %v277, %v326
        %v343 = vsub.f32 %v278, %v327
        %v344 = vsub.f32 %v279, %v328
        %v345 = vsub.f32 %v280, %v329
        %v346 = vsub.f32 %v281, %v330
        %v347 = vsub.f32 %v282, %v331
        %v348 = vsub.f32 %v283, %v332
        %v349 = vsub.f32 %v284, %v333
        %v350 = vsub.f32 %v285, %v334
        %v351 = vsub.f32 %v286, %v335
        %v352 = vsub.f32 %v287, %v336
        %v353 = vsub.f32 %v288, %v337
        %v354 = vsub.f32 %v289, %v338
        %v355 = vsub.f32 %v290, %v339
        %v356 = vmul.f32 %v340, %v340
        %v357 = vmul.f32 %v341, %v341
        %v358 = vmul.f32 %v342, %v342
        %v359 = vmul.f32 %v343, %v343
        %v360 = vmul.f32 %v344, %v344
        %v361 = vmul.f32 %v345, %v345
        %v362 = vmul.f32 %v346, %v346
        %v363 = vmul.f32 %v347, %v347
        %v364 = vmul.f32 %v348, %v348
        %v365 = vmul.f32 %v349, %v349
        %v366 = vmul.f32 %v350, %v350
        %v367 = vmul.f32 %v351, %v351
        %v368 = vmul.f32 %v352, %v352
        %v369 = vmul.f32 %v353, %v353
        %v370 = vmul.f32 %v354, %v354
        %v371 = vmul.f32 %v355, %v355
        %372 = vadd.xlane.f32.xlu0 %v356
        %v373 = vpop.xlane.xlu0 %372
        %374 = vadd.xlane.f32.xlu0 %v357
        %v375 = vpop.xlane.xlu0 %374
        %376 = vadd.xlane.f32.xlu0 %v358
        %v377 = vpop.xlane.xlu0 %376
        %378 = vadd.xlane.f32.xlu0 %v359
        %v379 = vpop.xlane.xlu0 %378
        %380 = vadd.xlane.f32.xlu0 %v360
        %v381 = vpop.xlane.xlu0 %380
        %382 = vadd.xlane.f32.xlu0 %v361
        %v383 = vpop.xlane.xlu0 %382
        %384 = vadd.xlane.f32.xlu0 %v362
        %v385 = vpop.xlane.xlu0 %384
        %386 = vadd.xlane.f32.xlu0 %v363
        %v387 = vpop.xlane.xlu0 %386
        %388 = vadd.xlane.f32.xlu0 %v364
        %v389 = vpop.xlane.xlu0 %388
        %390 = vadd.xlane.f32.xlu0 %v365
        %v391 = vpop.xlane.xlu0 %390
        %392 = vadd.xlane.f32.xlu0 %v366
        %v393 = vpop.xlane.xlu0 %392
        %394 = vadd.xlane.f32.xlu0 %v367
        %v395 = vpop.xlane.xlu0 %394
        %396 = vadd.xlane.f32.xlu0 %v368
        %v397 = vpop.xlane.xlu0 %396
        %398 = vadd.xlane.f32.xlu0 %v369
        %v399 = vpop.xlane.xlu0 %398
        %400 = vadd.xlane.f32.xlu0 %v370
        %v401 = vpop.xlane.xlu0 %400
        %402 = vadd.xlane.f32.xlu0 %v371
        %v403 = vpop.xlane.xlu0 %402
        %v404 = vmul.f32 %v373, %v323
        %v405 = vmul.f32 %v375, %v323
        %v406 = vmul.f32 %v377, %v323
        %v407 = vmul.f32 %v379, %v323
        %v408 = vmul.f32 %v381, %v323
        %v409 = vmul.f32 %v383, %v323
        %v410 = vmul.f32 %v385, %v323
        %v411 = vmul.f32 %v387, %v323
        %v412 = vmul.f32 %v389, %v323
        %v413 = vmul.f32 %v391, %v323
        %v414 = vmul.f32 %v393, %v323
        %v415 = vmul.f32 %v395, %v323
        %v416 = vmul.f32 %v397, %v323
        %v417 = vmul.f32 %v399, %v323
        %v418 = vmul.f32 %v401, %v323
        %v419 = vmul.f32 %v403, %v323
        %v420 = vadd.f32 %v404, 1e-05
        %v421 = vadd.f32 %v405, 1e-05
        %v422 = vadd.f32 %v406, 1e-05
        %v423 = vadd.f32 %v407, 1e-05
        %v424 = vadd.f32 %v408, 1e-05
        %v425 = vadd.f32 %v409, 1e-05
        %v426 = vadd.f32 %v410, 1e-05
        %v427 = vadd.f32 %v411, 1e-05
        %v428 = vadd.f32 %v412, 1e-05
        %v429 = vadd.f32 %v413, 1e-05
        %v430 = vadd.f32 %v414, 1e-05
        %v431 = vadd.f32 %v415, 1e-05
        %v432 = vadd.f32 %v416, 1e-05
        %v433 = vadd.f32 %v417, 1e-05
        %v434 = vadd.f32 %v418, 1e-05
        %v435 = vadd.f32 %v419, 1e-05
        %v436 = vrsqrt.pop %v420
        %v437 = vrsqrt.pop %v421
        %v438 = vrsqrt.pop %v422
        %v439 = vrsqrt.pop %v423
        %v440 = vrsqrt.pop %v424
        %v441 = vrsqrt.pop %v425
        %v442 = vrsqrt.pop %v426
        %v443 = vrsqrt.pop %v427
        %v444 = vrsqrt.pop %v428
        %v445 = vrsqrt.pop %v429
        %v446 = vrsqrt.pop %v430
        %v447 = vrsqrt.pop %v431
        %v448 = vrsqrt.pop %v432
        %v449 = vrsqrt.pop %v433
        %v450 = vrsqrt.pop %v434
        %v451 = vrsqrt.pop %v435
        %v452 = vmul.f32 %v340, %v436
        %v453 = vmul.f32 %v341, %v437
        %v454 = vmul.f32 %v342, %v438
        %v455 = vmul.f32 %v343, %v439
        %v456 = vmul.f32 %v344, %v440
        %v457 = vmul.f32 %v345, %v441
        %v458 = vmul.f32 %v346, %v442
        %v459 = vmul.f32 %v347, %v443
        %v460 = vmul.f32 %v348, %v444
        %v461 = vmul.f32 %v349, %v445
        %v462 = vmul.f32 %v350, %v446
        %v463 = vmul.f32 %v351, %v447
        %v464 = vmul.f32 %v352, %v448
        %v465 = vmul.f32 %v353, %v449
        %v466 = vmul.f32 %v354, %v450
        %v467 = vmul.f32 %v355, %v451
        %v468 = vpack.c.bf16 %v453, %v452
        %v469 = vpack.c.bf16 %v455, %v454
        %v470 = vpack.c.bf16 %v457, %v456
        %v471 = vpack.c.bf16 %v459, %v458
        %v472 = vpack.c.bf16 %v461, %v460
        %v473 = vpack.c.bf16 %v463, %v462
        %v474 = vpack.c.bf16 %v465, %v464
        %v475 = vpack.c.bf16 %v467, %v466
        %v476 = vld [vmem:[#allocation5] sm:$0xff]
        %v477 = vld [vmem:[#allocation5 + $0x8] sm:$0xff]
        %v478 = vld [vmem:[#allocation5 + $0x10] sm:$0xff]
        %v479 = vld [vmem:[#allocation5 + $0x18] sm:$0xff]
        %v480 = vld [vmem:[#allocation5 + $0x20] sm:$0xff]
        %v481 = vld [vmem:[#allocation5 + $0x28] sm:$0xff]
        %v482 = vld [vmem:[#allocation5 + $0x30] sm:$0xff]
        %v483 = vld [vmem:[#allocation5 + $0x38] sm:$0xff]
        %v484 = vld [vmem:[#allocation5 + $0x40] sm:$0xff]
        %v485 = vld [vmem:[#allocation5 + $0x48] sm:$0xff]
        %v486 = vld [vmem:[#allocation5 + $0x50] sm:$0xff]
        %v487 = vld [vmem:[#allocation5 + $0x58] sm:$0xff]
        %v488 = vld [vmem:[#allocation5 + $0x60] sm:$0xff]
        %v489 = vld [vmem:[#allocation5 + $0x68] sm:$0xff]
        %v490 = vld [vmem:[#allocation5 + $0x70] sm:$0xff]
        %v491 = vld [vmem:[#allocation5 + $0x78] sm:$0xff]
        %v492 = vld [vmem:[%s2] sm:$0x3]
        %v494 = vlaneseq
        %v495 = vshrl.u32 %v494, 7
        %v496 = vsub.s32 0, %v495
        %v497 = vrot.slane %v492, %v496
        %v498 = vlaneseq
        %v499 = vshrl.u32 %v498, 7
        %v500 = vsub.s32 1, %v499
        %v501 = vrot.slane %v492, %v500
        %v520 = vunpack.c.l.b16 %v476
        %v521 = vunpack.c.h.b16 %v476
        %v522 = vunpack.c.l.b16 %v477
        %v523 = vunpack.c.h.b16 %v477
        %v524 = vunpack.c.l.b16 %v478
        %v525 = vunpack.c.h.b16 %v478
        %v526 = vunpack.c.l.b16 %v479
        %v527 = vunpack.c.h.b16 %v479
        %v528 = vunpack.c.l.b16 %v480
        %v529 = vunpack.c.h.b16 %v480
        %v530 = vunpack.c.l.b16 %v481
        %v531 = vunpack.c.h.b16 %v481
        %v532 = vunpack.c.l.b16 %v482
        %v533 = vunpack.c.h.b16 %v482
        %v534 = vunpack.c.l.b16 %v483
        %v535 = vunpack.c.h.b16 %v483
        %v536 = vunpack.c.l.b16 %v484
        %v537 = vunpack.c.h.b16 %v484
        %v538 = vunpack.c.l.b16 %v485
        %v539 = vunpack.c.h.b16 %v485
        %v540 = vunpack.c.l.b16 %v486
        %v541 = vunpack.c.h.b16 %v486
        %v542 = vunpack.c.l.b16 %v487
        %v543 = vunpack.c.h.b16 %v487
        %v544 = vunpack.c.l.b16 %v488
        %v545 = vunpack.c.h.b16 %v488
        %v546 = vunpack.c.l.b16 %v489
        %v547 = vunpack.c.h.b16 %v489
        %v548 = vunpack.c.l.b16 %v490
        %v549 = vunpack.c.h.b16 %v490
        %v550 = vunpack.c.l.b16 %v491
        %v551 = vunpack.c.h.b16 %v491
        %v552 = vpack.c.b16 %v522, %v520
        %v553 = vpack.c.b16 %v523, %v521
        %v554 = vpack.c.b16 %v526, %v524
        %v555 = vpack.c.b16 %v527, %v525
        %v556 = vpack.c.b16 %v530, %v528
        %v557 = vpack.c.b16 %v531, %v529
        %v558 = vpack.c.b16 %v534, %v532
        %v559 = vpack.c.b16 %v535, %v533
        %v560 = vpack.c.b16 %v538, %v536
        %v561 = vpack.c.b16 %v539, %v537
        %v562 = vpack.c.b16 %v542, %v540
        %v563 = vpack.c.b16 %v543, %v541
        %v564 = vpack.c.b16 %v546, %v544
        %v565 = vpack.c.b16 %v547, %v545
        %v566 = vpack.c.b16 %v550, %v548
        %v567 = vpack.c.b16 %v551, %v549
        %584 = vmatprep.subr.bf16.mxu0 %v553
        %585 = vmatpush1.bf16.msra.mxu0 %v552
        %586 = vmatprep.subr.bf16.mxu0 %v555
        %587 = vmatpush1.bf16.msra.mxu0 %v554
        %588 = vmatprep.subr.bf16.mxu0 %v557
        %589 = vmatpush1.bf16.msra.mxu0 %v556
        %590 = vmatprep.subr.bf16.mxu0 %v559
        %591 = vmatpush1.bf16.msra.mxu0 %v558
        %592 = vmatprep.subr.bf16.mxu0 %v561
        %593 = vmatpush1.bf16.msra.mxu0 %v560
        %594 = vmatprep.subr.bf16.mxu0 %v563
        %595 = vmatpush1.bf16.msra.mxu0 %v562
        %596 = vmatprep.subr.bf16.mxu0 %v565
        %597 = vmatpush1.bf16.msra.mxu0 %v564
        %598 = vmatprep.subr.bf16.mxu0 %v567
        %599 = vmatpush1.bf16.msra.mxu0 %v566
        %600 = vmatprep.subr.bf16.mxu0 0
        %601 = vmatpush1.bf16.msra.mxu0 0
        %602 = vmatprep.subr.bf16.mxu0 0
        %603 = vmatpush1.bf16.msra.mxu0 0
        %604 = vmatprep.subr.bf16.mxu0 0
        %605 = vmatpush1.bf16.msra.mxu0 0
        %606 = vmatprep.subr.bf16.mxu0 0
        %607 = vmatpush1.bf16.msra.mxu0 0
        %608 = vmatprep.subr.bf16.mxu0 0
        %609 = vmatpush1.bf16.msra.mxu0 0
        %610 = vmatprep.subr.bf16.mxu0 0
        %611 = vmatpush1.bf16.msra.mxu0 0
        %612 = vmatprep.subr.bf16.mxu0 0
        %613 = vmatpush1.bf16.msra.mxu0 0
        %614 = vmatprep.subr.bf16.mxu0 0
        %615 = vmatpush1.bf16.msra.mxu0 0
        %616 = vmatprep.mubr.bf16.mxu0 0
        %617 = vmatmul.mubr.bf16.gmra.mrb[0].mxu0 %v468
        %v618 = vpop.f32.mrb[0].mxu0
        %v619 = vadd.f32 %v497, %v618
        %v620 = vpop.f32.mrb[0].mxu0
        %v621 = vadd.f32 %v501, %v620
        %v622 = vpop.f32.mrb[0].mxu0
        %v623 = vadd.f32 %v497, %v622
        %v624 = vpop.f32.mrb[0].mxu0
        %v625 = vadd.f32 %v501, %v624
        %626 = vmatprep.mubr.bf16.mxu0 0
        %627 = vmatmul.mubr.bf16.gmra.mrb[0].mxu0 %v469
        %v628 = vpop.f32.mrb[0].mxu0
        %v629 = vadd.f32 %v497, %v628
        %v630 = vpop.f32.mrb[0].mxu0
        %v631 = vadd.f32 %v501, %v630
        %v632 = vpop.f32.mrb[0].mxu0
        %v633 = vadd.f32 %v497, %v632
        %v634 = vpop.f32.mrb[0].mxu0
        %v635 = vadd.f32 %v501, %v634
        %636 = vmatprep.mubr.bf16.mxu0 0
        %637 = vmatmul.mubr.bf16.gmra.mrb[0].mxu0 %v470
        %v638 = vpop.f32.mrb[0].mxu0
        %v639 = vadd.f32 %v497, %v638
        %v640 = vpop.f32.mrb[0].mxu0
        %v641 = vadd.f32 %v501, %v640
        %v642 = vpop.f32.mrb[0].mxu0
        %v643 = vadd.f32 %v497, %v642
        %v644 = vpop.f32.mrb[0].mxu0
        %v645 = vadd.f32 %v501, %v644
        %646 = vmatprep.mubr.bf16.mxu0 0
        %647 = vmatmul.mubr.bf16.gmra.mrb[0].mxu0 %v471
        %v648 = vpop.f32.mrb[0].mxu0
        %v649 = vadd.f32 %v497, %v648
        %v650 = vpop.f32.mrb[0].mxu0
        %v651 = vadd.f32 %v501, %v650
        %v652 = vpop.f32.mrb[0].mxu0
        %v653 = vadd.f32 %v497, %v652
        %v654 = vpop.f32.mrb[0].mxu0
        %v655 = vadd.f32 %v501, %v654
        %656 = vmatprep.mubr.bf16.mxu0 0
        %657 = vmatmul.mubr.bf16.gmra.mrb[0].mxu0 %v472
        %v658 = vpop.f32.mrb[0].mxu0
        %v659 = vadd.f32 %v497, %v658
        %v660 = vpop.f32.mrb[0].mxu0
        %v661 = vadd.f32 %v501, %v660
        %v662 = vpop.f32.mrb[0].mxu0
        %v663 = vadd.f32 %v497, %v662
        %v664 = vpop.f32.mrb[0].mxu0
        %v665 = vadd.f32 %v501, %v664
        %666 = vmatprep.mubr.bf16.mxu0 0
        %667 = vmatmul.mubr.bf16.gmra.mrb[0].mxu0 %v473
        %v668 = vpop.f32.mrb[0].mxu0
        %v669 = vadd.f32 %v497, %v668
        %v670 = vpop.f32.mrb[0].mxu0
        %v671 = vadd.f32 %v501, %v670
        %v672 = vpop.f32.mrb[0].mxu0
        %v673 = vadd.f32 %v497, %v672
        %v674 = vpop.f32.mrb[0].mxu0
        %v675 = vadd.f32 %v501, %v674
        %676 = vmatprep.mubr.bf16.mxu0 0
        %677 = vmatmul.mubr.bf16.gmra.mrb[0].mxu0 %v474
        %v678 = vpop.f32.mrb[0].mxu0
        %v679 = vadd.f32 %v497, %v678
        %v680 = vpop.f32.mrb[0].mxu0
        %v681 = vadd.f32 %v501, %v680
        %v682 = vpop.f32.mrb[0].mxu0
        %v683 = vadd.f32 %v497, %v682
        %v684 = vpop.f32.mrb[0].mxu0
        %v685 = vadd.f32 %v501, %v684
        %686 = vmatprep.mubr.bf16.mxu0 0
        %687 = vmatmul.mubr.bf16.gmra.mrb[0].mxu0 %v475
        %v688 = vpop.f32.mrb[0].mxu0
        %v689 = vadd.f32 %v497, %v688
        %v690 = vpop.f32.mrb[0].mxu0
        %v691 = vadd.f32 %v501, %v690
        %v692 = vpop.f32.mrb[0].mxu0
        %v693 = vadd.f32 %v497, %v692
        %v694 = vpop.f32.mrb[0].mxu0
        %v695 = vadd.f32 %v501, %v694
        %696 = vdwg.mxu0
        %v697 = vxor.u32 %v619, 2147483648
        %v698 = vxor.u32 %v621, 2147483648
        %v699 = vxor.u32 %v623, 2147483648
        %v700 = vxor.u32 %v625, 2147483648
        %v701 = vxor.u32 %v629, 2147483648
        %v702 = vxor.u32 %v631, 2147483648
        %v703 = vxor.u32 %v633, 2147483648
        %v704 = vxor.u32 %v635, 2147483648
        %v705 = vxor.u32 %v639, 2147483648
        %v706 = vxor.u32 %v641, 2147483648
        %v707 = vxor.u32 %v643, 2147483648
        %v708 = vxor.u32 %v645, 2147483648
        %v709 = vxor.u32 %v649, 2147483648
        %v710 = vxor.u32 %v651, 2147483648
        %v711 = vxor.u32 %v653, 2147483648
        %v712 = vxor.u32 %v655, 2147483648
        %v713 = vxor.u32 %v659, 2147483648
        %v714 = vxor.u32 %v661, 2147483648
        %v715 = vxor.u32 %v663, 2147483648
        %v716 = vxor.u32 %v665, 2147483648
        %v717 = vxor.u32 %v669, 2147483648
        %v718 = vxor.u32 %v671, 2147483648
        %v719 = vxor.u32 %v673, 2147483648
        %v720 = vxor.u32 %v675, 2147483648
        %v721 = vxor.u32 %v679, 2147483648
        %v722 = vxor.u32 %v681, 2147483648
        %v723 = vxor.u32 %v683, 2147483648
        %v724 = vxor.u32 %v685, 2147483648
        %v725 = vxor.u32 %v689, 2147483648
        %v726 = vxor.u32 %v691, 2147483648
        %v727 = vxor.u32 %v693, 2147483648
        %v728 = vxor.u32 %v695, 2147483648
        %v729 = vmul.f32 %v697, 1.442695
        %v730 = vpow.pop %v729
        %v731 = vmul.f32 %v698, 1.442695
        %v732 = vpow.pop %v731
        %v733 = vmul.f32 %v699, 1.442695
        %v734 = vpow.pop %v733
        %v735 = vmul.f32 %v700, 1.442695
        %v736 = vpow.pop %v735
        %v737 = vmul.f32 %v701, 1.442695
        %v738 = vpow.pop %v737
        %v739 = vmul.f32 %v702, 1.442695
        %v740 = vpow.pop %v739
        %v741 = vmul.f32 %v703, 1.442695
        %v742 = vpow.pop %v741
        %v743 = vmul.f32 %v704, 1.442695
        %v744 = vpow.pop %v743
        %v745 = vmul.f32 %v705, 1.442695
        %v746 = vpow.pop %v745
        %v747 = vmul.f32 %v706, 1.442695
        %v748 = vpow.pop %v747
        %v749 = vmul.f32 %v707, 1.442695
        %v750 = vpow.pop %v749
        %v751 = vmul.f32 %v708, 1.442695
        %v752 = vpow.pop %v751
        %v753 = vmul.f32 %v709, 1.442695
        %v754 = vpow.pop %v753
        %v755 = vmul.f32 %v710, 1.442695
        %v756 = vpow.pop %v755
        %v757 = vmul.f32 %v711, 1.442695
        %v758 = vpow.pop %v757
        %v759 = vmul.f32 %v712, 1.442695
        %v760 = vpow.pop %v759
        %v761 = vmul.f32 %v713, 1.442695
        %v762 = vpow.pop %v761
        %v763 = vmul.f32 %v714, 1.442695
        %v764 = vpow.pop %v763
        %v765 = vmul.f32 %v715, 1.442695
        %v766 = vpow.pop %v765
        %v767 = vmul.f32 %v716, 1.442695
        %v768 = vpow.pop %v767
        %v769 = vmul.f32 %v717, 1.442695
        %v770 = vpow.pop %v769
        %v771 = vmul.f32 %v718, 1.442695
        %v772 = vpow.pop %v771
        %v773 = vmul.f32 %v719, 1.442695
        %v774 = vpow.pop %v773
        %v775 = vmul.f32 %v720, 1.442695
        %v776 = vpow.pop %v775
        %v777 = vmul.f32 %v721, 1.442695
        %v778 = vpow.pop %v777
        %v779 = vmul.f32 %v722, 1.442695
        %v780 = vpow.pop %v779
        %v781 = vmul.f32 %v723, 1.442695
        %v782 = vpow.pop %v781
        %v783 = vmul.f32 %v724, 1.442695
        %v784 = vpow.pop %v783
        %v785 = vmul.f32 %v725, 1.442695
        %v786 = vpow.pop %v785
        %v787 = vmul.f32 %v726, 1.442695
        %v788 = vpow.pop %v787
        %v789 = vmul.f32 %v727, 1.442695
        %v790 = vpow.pop %v789
        %v791 = vmul.f32 %v728, 1.442695
        %v792 = vpow.pop %v791
        %v793 = vadd.f32 %v730, 1.0
        %v794 = vadd.f32 %v732, 1.0
        %v795 = vadd.f32 %v734, 1.0
        %v796 = vadd.f32 %v736, 1.0
        %v797 = vadd.f32 %v738, 1.0
        %v798 = vadd.f32 %v740, 1.0
        %v799 = vadd.f32 %v742, 1.0
        %v800 = vadd.f32 %v744, 1.0
        %v801 = vadd.f32 %v746, 1.0
        %v802 = vadd.f32 %v748, 1.0
        %v803 = vadd.f32 %v750, 1.0
        %v804 = vadd.f32 %v752, 1.0
        %v805 = vadd.f32 %v754, 1.0
        %v806 = vadd.f32 %v756, 1.0
        %v807 = vadd.f32 %v758, 1.0
        %v808 = vadd.f32 %v760, 1.0
        %v809 = vadd.f32 %v762, 1.0
        %v810 = vadd.f32 %v764, 1.0
        %v811 = vadd.f32 %v766, 1.0
        %v812 = vadd.f32 %v768, 1.0
        %v813 = vadd.f32 %v770, 1.0
        %v814 = vadd.f32 %v772, 1.0
        %v815 = vadd.f32 %v774, 1.0
        %v816 = vadd.f32 %v776, 1.0
        %v817 = vadd.f32 %v778, 1.0
        %v818 = vadd.f32 %v780, 1.0
        %v819 = vadd.f32 %v782, 1.0
        %v820 = vadd.f32 %v784, 1.0
        %v821 = vadd.f32 %v786, 1.0
        %v822 = vadd.f32 %v788, 1.0
        %v823 = vadd.f32 %v790, 1.0
        %v824 = vadd.f32 %v792, 1.0
        %v825 = vrcp.pop %v793
        %v826 = vmul.f32 1.0, %v825
        %v827 = vrcp.pop %v794
        %v828 = vmul.f32 1.0, %v827
        %v829 = vrcp.pop %v795
        %v830 = vmul.f32 1.0, %v829
        %v831 = vrcp.pop %v796
        %v832 = vmul.f32 1.0, %v831
        %v833 = vrcp.pop %v797
        %v834 = vmul.f32 1.0, %v833
        %v835 = vrcp.pop %v798
        %v836 = vmul.f32 1.0, %v835
        %v837 = vrcp.pop %v799
        %v838 = vmul.f32 1.0, %v837
        %v839 = vrcp.pop %v800
        %v840 = vmul.f32 1.0, %v839
        %v841 = vrcp.pop %v801
        %v842 = vmul.f32 1.0, %v841
        %v843 = vrcp.pop %v802
        %v844 = vmul.f32 1.0, %v843
        %v845 = vrcp.pop %v803
        %v846 = vmul.f32 1.0, %v845
        %v847 = vrcp.pop %v804
        %v848 = vmul.f32 1.0, %v847
        %v849 = vrcp.pop %v805
        %v850 = vmul.f32 1.0, %v849
        %v851 = vrcp.pop %v806
        %v852 = vmul.f32 1.0, %v851
        %v853 = vrcp.pop %v807
        %v854 = vmul.f32 1.0, %v853
        %v855 = vrcp.pop %v808
        %v856 = vmul.f32 1.0, %v855
        %v857 = vrcp.pop %v809
        %v858 = vmul.f32 1.0, %v857
        %v859 = vrcp.pop %v810
        %v860 = vmul.f32 1.0, %v859
        %v861 = vrcp.pop %v811
        %v862 = vmul.f32 1.0, %v861
        %v863 = vrcp.pop %v812
        %v864 = vmul.f32 1.0, %v863
        %v865 = vrcp.pop %v813
        %v866 = vmul.f32 1.0, %v865
        %v867 = vrcp.pop %v814
        %v868 = vmul.f32 1.0, %v867
        %v869 = vrcp.pop %v815
        %v870 = vmul.f32 1.0, %v869
        %v871 = vrcp.pop %v816
        %v872 = vmul.f32 1.0, %v871
        %v873 = vrcp.pop %v817
        %v874 = vmul.f32 1.0, %v873
        %v875 = vrcp.pop %v818
        %v876 = vmul.f32 1.0, %v875
        %v877 = vrcp.pop %v819
        %v878 = vmul.f32 1.0, %v877
        %v879 = vrcp.pop %v820
        %v880 = vmul.f32 1.0, %v879
        %v881 = vrcp.pop %v821
        %v882 = vmul.f32 1.0, %v881
        %v883 = vrcp.pop %v822
        %v884 = vmul.f32 1.0, %v883
        %v885 = vrcp.pop %v823
        %v886 = vmul.f32 1.0, %v885
        %v887 = vrcp.pop %v824
        %v888 = vmul.f32 1.0, %v887
        %v889 = vmul.f32 %v619, %v826
        %v890 = vmul.f32 %v621, %v828
        %v891 = vmul.f32 %v623, %v830
        %v892 = vmul.f32 %v625, %v832
        %v893 = vmul.f32 %v629, %v834
        %v894 = vmul.f32 %v631, %v836
        %v895 = vmul.f32 %v633, %v838
        %v896 = vmul.f32 %v635, %v840
        %v897 = vmul.f32 %v639, %v842
        %v898 = vmul.f32 %v641, %v844
        %v899 = vmul.f32 %v643, %v846
        %v900 = vmul.f32 %v645, %v848
        %v901 = vmul.f32 %v649, %v850
        %v902 = vmul.f32 %v651, %v852
        %v903 = vmul.f32 %v653, %v854
        %v904 = vmul.f32 %v655, %v856
        %v905 = vmul.f32 %v659, %v858
        %v906 = vmul.f32 %v661, %v860
        %v907 = vmul.f32 %v663, %v862
        %v908 = vmul.f32 %v665, %v864
        %v909 = vmul.f32 %v669, %v866
        %v910 = vmul.f32 %v671, %v868
        %v911 = vmul.f32 %v673, %v870
        %v912 = vmul.f32 %v675, %v872
        %v913 = vmul.f32 %v679, %v874
        %v914 = vmul.f32 %v681, %v876
        %v915 = vmul.f32 %v683, %v878
        %v916 = vmul.f32 %v685, %v880
        %v917 = vmul.f32 %v689, %v882
        %v918 = vmul.f32 %v691, %v884
        %v919 = vmul.f32 %v693, %v886
        %v920 = vmul.f32 %v695, %v888
        %v921 = vpack.c.bf16 %v891, %v889
        %v922 = vpack.c.bf16 %v892, %v890
        %v923 = vpack.c.bf16 %v895, %v893
        %v924 = vpack.c.bf16 %v896, %v894
        %v925 = vpack.c.bf16 %v899, %v897
        %v926 = vpack.c.bf16 %v900, %v898
        %v927 = vpack.c.bf16 %v903, %v901
        %v928 = vpack.c.bf16 %v904, %v902
        %v929 = vpack.c.bf16 %v907, %v905
        %v930 = vpack.c.bf16 %v908, %v906
        %v931 = vpack.c.bf16 %v911, %v909
        %v932 = vpack.c.bf16 %v912, %v910
        %v933 = vpack.c.bf16 %v915, %v913
        %v934 = vpack.c.bf16 %v916, %v914
        %v935 = vpack.c.bf16 %v919, %v917
        %v936 = vpack.c.bf16 %v920, %v918
        %v937 = vld [vmem:[#allocation7] sm:$0xf]
        %v938 = vld [vmem:[#allocation7 + $0x4] sm:$0xf]
        %v939 = vld [vmem:[#allocation7 + $0x8] sm:$0xf]
        %v940 = vld [vmem:[#allocation7 + $0xc] sm:$0xf]
        %v941 = vld [vmem:[#allocation7 + $0x10] sm:$0xf]
        %v942 = vld [vmem:[#allocation7 + $0x14] sm:$0xf]
        %v943 = vld [vmem:[#allocation7 + $0x18] sm:$0xf]
        %v944 = vld [vmem:[#allocation7 + $0x1c] sm:$0xf]
        %v945 = vld [vmem:[#allocation7 + $0x20] sm:$0xf]
        %v946 = vld [vmem:[#allocation7 + $0x24] sm:$0xf]
        %v947 = vld [vmem:[#allocation7 + $0x28] sm:$0xf]
        %v948 = vld [vmem:[#allocation7 + $0x2c] sm:$0xf]
        %v949 = vld [vmem:[#allocation7 + $0x30] sm:$0xf]
        %v950 = vld [vmem:[#allocation7 + $0x34] sm:$0xf]
        %v951 = vld [vmem:[#allocation7 + $0x38] sm:$0xf]
        %v952 = vld [vmem:[#allocation7 + $0x3c] sm:$0xf]
        %v953 = vld [vmem:[#allocation7 + $0x40] sm:$0xf]
        %v954 = vld [vmem:[#allocation7 + $0x44] sm:$0xf]
        %v955 = vld [vmem:[#allocation7 + $0x48] sm:$0xf]
        %v956 = vld [vmem:[#allocation7 + $0x4c] sm:$0xf]
        %v957 = vld [vmem:[#allocation7 + $0x50] sm:$0xf]
        %v958 = vld [vmem:[#allocation7 + $0x54] sm:$0xf]
        %v959 = vld [vmem:[#allocation7 + $0x58] sm:$0xf]
        %v960 = vld [vmem:[#allocation7 + $0x5c] sm:$0xf]
        %v961 = vld [vmem:[#allocation7 + $0x60] sm:$0xf]
        %v962 = vld [vmem:[#allocation7 + $0x64] sm:$0xf]
        %v963 = vld [vmem:[#allocation7 + $0x68] sm:$0xf]
        %v964 = vld [vmem:[#allocation7 + $0x6c] sm:$0xf]
        %v965 = vld [vmem:[#allocation7 + $0x70] sm:$0xf]
        %v966 = vld [vmem:[#allocation7 + $0x74] sm:$0xf]
        %v967 = vld [vmem:[#allocation7 + $0x78] sm:$0xf]
        %v968 = vld [vmem:[#allocation7 + $0x7c] sm:$0xf]
        %v969 = vld [vmem:[%s4] sm:$0x1]
        %v971 = vlaneseq
        %v972 = vshrl.u32 %v971, 7
        %v973 = vsub.s32 0, %v972
        %v974 = vrot.slane %v969, %v973
        %v1008 = vunpack.c.l.b16 %v937
        %v1009 = vunpack.c.l.b16 %v938
        %v1010 = vunpack.c.l.b16 %v939
        %v1011 = vunpack.c.l.b16 %v940
        %v1012 = vunpack.c.l.b16 %v941
        %v1013 = vunpack.c.l.b16 %v942
        %v1014 = vunpack.c.l.b16 %v943
        %v1015 = vunpack.c.l.b16 %v944
        %v1016 = vunpack.c.l.b16 %v945
        %v1017 = vunpack.c.l.b16 %v946
        %v1018 = vunpack.c.l.b16 %v947
        %v1019 = vunpack.c.l.b16 %v948
        %v1020 = vunpack.c.l.b16 %v949
        %v1021 = vunpack.c.l.b16 %v950
        %v1022 = vunpack.c.l.b16 %v951
        %v1023 = vunpack.c.l.b16 %v952
        %v1024 = vunpack.c.l.b16 %v953
        %v1025 = vunpack.c.l.b16 %v954
        %v1026 = vunpack.c.l.b16 %v955
        %v1027 = vunpack.c.l.b16 %v956
        %v1028 = vunpack.c.l.b16 %v957
        %v1029 = vunpack.c.l.b16 %v958
        %v1030 = vunpack.c.l.b16 %v959
        %v1031 = vunpack.c.l.b16 %v960
        %v1032 = vunpack.c.l.b16 %v961
        %v1033 = vunpack.c.l.b16 %v962
        %v1034 = vunpack.c.l.b16 %v963
        %v1035 = vunpack.c.l.b16 %v964
        %v1036 = vunpack.c.l.b16 %v965
        %v1037 = vunpack.c.l.b16 %v966
        %v1038 = vunpack.c.l.b16 %v967
        %v1039 = vunpack.c.l.b16 %v968
        %v1040 = vpack.c.b16 %v1009, %v1008
        %v1041 = vpack.c.b16 %v1011, %v1010
        %v1042 = vpack.c.b16 %v1013, %v1012
        %v1043 = vpack.c.b16 %v1015, %v1014
        %v1044 = vpack.c.b16 %v1017, %v1016
        %v1045 = vpack.c.b16 %v1019, %v1018
        %v1046 = vpack.c.b16 %v1021, %v1020
        %v1047 = vpack.c.b16 %v1023, %v1022
        %v1048 = vpack.c.b16 %v1025, %v1024
        %v1049 = vpack.c.b16 %v1027, %v1026
        %v1050 = vpack.c.b16 %v1029, %v1028
        %v1051 = vpack.c.b16 %v1031, %v1030
        %v1052 = vpack.c.b16 %v1033, %v1032
        %v1053 = vpack.c.b16 %v1035, %v1034
        %v1054 = vpack.c.b16 %v1037, %v1036
        %v1055 = vpack.c.b16 %v1039, %v1038
        %1072 = vmatprep.subr.bf16.mxu0 0
        %1073 = vmatpush1.bf16.msra.mxu0 %v1040
        %1074 = vmatprep.subr.bf16.mxu0 0
        %1075 = vmatpush1.bf16.msra.mxu0 %v1041
        %1076 = vmatprep.subr.bf16.mxu0 0
        %1077 = vmatpush1.bf16.msra.mxu0 %v1042
        %1078 = vmatprep.subr.bf16.mxu0 0
        %1079 = vmatpush1.bf16.msra.mxu0 %v1043
        %1080 = vmatprep.subr.bf16.mxu0 0
        %1081 = vmatpush1.bf16.msra.mxu0 %v1044
        %1082 = vmatprep.subr.bf16.mxu0 0
        %1083 = vmatpush1.bf16.msra.mxu0 %v1045
        %1084 = vmatprep.subr.bf16.mxu0 0
        %1085 = vmatpush1.bf16.msra.mxu0 %v1046
        %1086 = vmatprep.subr.bf16.mxu0 0
        %1087 = vmatpush1.bf16.msra.mxu0 %v1047
        %1088 = vmatprep.subr.bf16.mxu0 0
        %1089 = vmatpush1.bf16.msra.mxu0 %v1048
        %1090 = vmatprep.subr.bf16.mxu0 0
        %1091 = vmatpush1.bf16.msra.mxu0 %v1049
        %1092 = vmatprep.subr.bf16.mxu0 0
        %1093 = vmatpush1.bf16.msra.mxu0 %v1050
        %1094 = vmatprep.subr.bf16.mxu0 0
        %1095 = vmatpush1.bf16.msra.mxu0 %v1051
        %1096 = vmatprep.subr.bf16.mxu0 0
        %1097 = vmatpush1.bf16.msra.mxu0 %v1052
        %1098 = vmatprep.subr.bf16.mxu0 0
        %1099 = vmatpush1.bf16.msra.mxu0 %v1053
        %1100 = vmatprep.subr.bf16.mxu0 0
        %1101 = vmatpush1.bf16.msra.mxu0 %v1054
        %1102 = vmatprep.subr.bf16.mxu0 0
        %1103 = vmatpush1.bf16.msra.mxu0 %v1055
        %1104 = vmatprep.mubr.bf16.mxu0 %v922
        %1105 = vmatmul.mubr.bf16.gmra.mrb[0].mxu0 %v921
        %v1106 = vpop.f32.mrb[0].mxu0
        %v1107 = vadd.f32 %v974, %v1106
        %v1108 = vpop.f32.mrb[0].mxu0
        %v1109 = vpop.f32.mrb[0].mxu0
        %v1110 = vadd.f32 %v974, %v1109
        %v1111 = vpop.f32.mrb[0].mxu0
        %1112 = vmatprep.mubr.bf16.mxu0 %v924
        %1113 = vmatmul.mubr.bf16.gmra.mrb[0].mxu0 %v923
        %v1114 = vpop.f32.mrb[0].mxu0
        %v1115 = vadd.f32 %v974, %v1114
        %v1116 = vpop.f32.mrb[0].mxu0
        %v1117 = vpop.f32.mrb[0].mxu0
        %v1118 = vadd.f32 %v974, %v1117
        %v1119 = vpop.f32.mrb[0].mxu0
        %1120 = vmatprep.mubr.bf16.mxu0 %v926
        %1121 = vmatmul.mubr.bf16.gmra.mrb[0].mxu0 %v925
        %v1122 = vpop.f32.mrb[0].mxu0
        %v1123 = vadd.f32 %v974, %v1122
        %v1124 = vpop.f32.mrb[0].mxu0
        %v1125 = vpop.f32.mrb[0].mxu0
        %v1126 = vadd.f32 %v974, %v1125
        %v1127 = vpop.f32.mrb[0].mxu0
        %1128 = vmatprep.mubr.bf16.mxu0 %v928
        %1129 = vmatmul.mubr.bf16.gmra.mrb[0].mxu0 %v927
        %v1130 = vpop.f32.mrb[0].mxu0
        %v1131 = vadd.f32 %v974, %v1130
        %v1132 = vpop.f32.mrb[0].mxu0
        %v1133 = vpop.f32.mrb[0].mxu0
        %v1134 = vadd.f32 %v974, %v1133
        %v1135 = vpop.f32.mrb[0].mxu0
        %1136 = vmatprep.mubr.bf16.mxu0 %v930
        %1137 = vmatmul.mubr.bf16.gmra.mrb[0].mxu0 %v929
        %v1138 = vpop.f32.mrb[0].mxu0
        %v1139 = vadd.f32 %v974, %v1138
        %v1140 = vpop.f32.mrb[0].mxu0
        %v1141 = vpop.f32.mrb[0].mxu0
        %v1142 = vadd.f32 %v974, %v1141
        %v1143 = vpop.f32.mrb[0].mxu0
        %1144 = vmatprep.mubr.bf16.mxu0 %v932
        %1145 = vmatmul.mubr.bf16.gmra.mrb[0].mxu0 %v931
        %v1146 = vpop.f32.mrb[0].mxu0
        %v1147 = vadd.f32 %v974, %v1146
        %v1148 = vpop.f32.mrb[0].mxu0
        %v1149 = vpop.f32.mrb[0].mxu0
        %v1150 = vadd.f32 %v974, %v1149
        %v1151 = vpop.f32.mrb[0].mxu0
        %1152 = vmatprep.mubr.bf16.mxu0 %v934
        %1153 = vmatmul.mubr.bf16.gmra.mrb[0].mxu0 %v933
        %v1154 = vpop.f32.mrb[0].mxu0
        %v1155 = vadd.f32 %v974, %v1154
        %v1156 = vpop.f32.mrb[0].mxu0
        %v1157 = vpop.f32.mrb[0].mxu0
        %v1158 = vadd.f32 %v974, %v1157
        %v1159 = vpop.f32.mrb[0].mxu0
        %1160 = vmatprep.mubr.bf16.mxu0 %v936
        %1161 = vmatmul.mubr.bf16.gmra.mrb[0].mxu0 %v935
        %v1162 = vpop.f32.mrb[0].mxu0
        %v1163 = vadd.f32 %v974, %v1162
        %v1164 = vpop.f32.mrb[0].mxu0
        %v1165 = vpop.f32.mrb[0].mxu0
        %v1166 = vadd.f32 %v974, %v1165
        %v1167 = vpop.f32.mrb[0].mxu0
        %1168 = vdwg.mxu0
        %1169 = vst [vmem:[%s271] sm:$0xff] %v1107
        %1170 = vst [vmem:[%s271 + $0x8] sm:$0xff] %v1110
        %1171 = vst [vmem:[%s271 + $0x10] sm:$0xff] %v1115
        %1172 = vst [vmem:[%s271 + $0x18] sm:$0xff] %v1118
        %1173 = vst [vmem:[%s271 + $0x20] sm:$0xff] %v1123
        %1174 = vst [vmem:[%s271 + $0x28] sm:$0xff] %v1126
        %1175 = vst [vmem:[%s271 + $0x30] sm:$0xff] %v1131
        %1176 = vst [vmem:[%s271 + $0x38] sm:$0xff] %v1134
        %1177 = vst [vmem:[%s271 + $0x40] sm:$0xff] %v1139
        %1178 = vst [vmem:[%s271 + $0x48] sm:$0xff] %v1142
        %1179 = vst [vmem:[%s271 + $0x50] sm:$0xff] %v1147
        %1180 = vst [vmem:[%s271 + $0x58] sm:$0xff] %v1150
        %1181 = vst [vmem:[%s271 + $0x60] sm:$0xff] %v1155
        %1182 = vst [vmem:[%s271 + $0x68] sm:$0xff] %v1158
        %1183 = vst [vmem:[%s271 + $0x70] sm:$0xff] %v1163
        %1184 = vst [vmem:[%s271 + $0x78] sm:$0xff] %v1166
        %s1185 = sand.u32 %s141, 1
        %s1186 = scalar_lea.sflag [#allocation4], %s1185
        %s1187 = sand.u32 %s141, 1
        %s1188 = smul.addr %s1187, 128
        %s1189 = scalar_lea.vmem [#allocation8], %s1188
        // Predicated region
        $region53: #{feedforward_forward.1} parent=39 // pred_check
          %p1190 = pneg %p151
        $region54: #{feedforward_forward.1} parent=39 // pred_check_branch
          %1192 = sbr.rel (%p1190) target = $region56
        $region55: #{feedforward_forward.1} parent=39 // pred_region
          %s1193 = smul.u32 16, %s23
          %s1195 = ssub.s32 2048, 2048
          %1196 = vsyncadd %s1186, %s1195
          %s1197 = smul.addr %s1193, 128
          %s1198 = scalar_lea.hbm %s5, %s1197
          %s1199 = sshll.u32 %s1189, 4
          %s1200 = int_to_ptr.vmem [resolvable:$true] %s1199
          %1205 = dma.vmem_to_hbm [thread:$0]  %s1200, 2048, %s1198, %s1186, 128, 128, 8
        $region56: #{feedforward_forward.1} parent=39 // pred_fallthru
          _
      $region40: #{feedforward_forward.1} parent=5 // pred_fallthru
        _
      %p1206 = scmp.le.s32.totalorder 2, %s18
      // Predicated region
      $region57: #{feedforward_forward.1} parent=5 // pred_check
        %p1207 = pneg %p1206
      $region58: #{feedforward_forward.1} parent=5 // pred_check_branch
        %1209 = sbr.rel (%p1207) target = $region60
      $region59: #{feedforward_forward.1} parent=5 // pred_region
        %s1210 = ssub.s32 %s18, 2
        // Predicated region
        $region61: #{feedforward_forward.1} parent=59 // pred_check
          %p1211 = pneg %p157
        $region62: #{feedforward_forward.1} parent=59 // pred_check_branch
          %1213 = sbr.rel (%p1211) target = $region64
        $region63: #{feedforward_forward.1} parent=59 // pred_region
          %s1214 = sand.u32 %s142, 1
          %s1215 = scalar_lea.sflag [#allocation4], %s1214
          %s1216 = sand.u32 %s142, 1
          %s1217 = smul.addr %s1216, 128
          %s1218 = scalar_lea.vmem [#allocation8], %s1217
          %1219 = dma.done %s1215, 2048
        $region64: #{feedforward_forward.1} parent=59 // pred_fallthru
          _
      $region60: #{feedforward_forward.1} parent=5 // pred_fallthru
        _
    $region6: #{feedforward_forward.1} parent=1 // loop_footer
      %s22 = sadd.s32 1, %s18
    $region7: #{feedforward_forward.1} parent=1 // loop_footer_branch
      %17 = sbr.rel target = $region3
    $region8: #{feedforward_forward.1} parent=1 // loop_exit
      _
    %1220 = vsyncpa [#allocation3], 1
    %s1221 = scalar_lea.sflag [#allocation3], 1
    %1222 = vsyncpa %s1221, 1
    %1223 = vsyncpa [#allocation6], 1
    %1224 = vsyncpa [#allocation4], 1
    %s1225 = scalar_lea.sflag [#allocation4], 1
    %1226 = vsyncpa %s1225, 1

</llo_original>
